<compile_context>
chip_gen: v6e
topology: v6e:2x2x1
jax: 0.10.0
libtpu: 0.0.40
codegen_flags: <defaults>
</compile_context>

<pallas_src>
import functools
import math

import numpy as np
import jax
import jax.numpy as jnp
from jax.experimental import pallas as pl
from jax.experimental.pallas import tpu as pltpu


def make_positional_encoding(d_model: int, max_len: int = 5000,
                             dtype=jnp.float32) -> jnp.ndarray:
    """Deterministic buffer, same math as the PyTorch __init__.

    Returned shape is (max_len, d_model) (the size-1 batch axis is dropped). The dtype
    matches the activations; if that is bf16 the add is done in bf16 (slightly less
    accurate than PyTorch's f32 broadcast-add, accepted for the HBM saving).
    """
    position = np.arange(0, max_len, dtype=np.float32)[:, None]               # (max_len, 1)
    div_term = np.exp(
        np.arange(0, d_model, 2, dtype=np.float32) * (-math.log(10000.0) / d_model)
    )                                                                          # (ceil(d/2),)
    pe = np.zeros((max_len, d_model), dtype=np.float32)
    pe[:, 0::2] = np.sin(position * div_term)
    pe[:, 1::2] = np.cos(position * div_term[: d_model // 2])                  # robust to odd d_model
    return jnp.asarray(pe, dtype=dtype)


def _add_pe_kernel(x_ref, pe_ref, o_ref, *, batch: int):
    # x_ref/o_ref: (TS, B*D)   pe_ref: (TS, D)
    pe = pe_ref[...]
    if batch > 1:
        # Column j of the flattened x is (b*D + d) -> needs pe[:, d]; lane-tiling the
        # small pe tile B times reproduces exactly that. When D is a multiple of 128
        # this is whole-vreg copies; otherwise a few XLU rotates (still DMA-bound).
        pe = jnp.tile(pe, (1, batch))
    o_ref[...] = x_ref[...] + pe


def _sublane_multiple(dtype) -> int:
    """Minimum second-to-last block-dim alignment: sub-32-bit dtypes pack along sublanes."""
    return {4: 8, 2: 16, 1: 32}.get(jnp.dtype(dtype).itemsize, 8)


def _vmem_capacity_bytes() -> int:
    try:
        return int(pltpu.get_tpu_info().vmem_capacity_bytes)
    except Exception:  # pragma: no cover - info query unavailable (e.g. interpret mode)
        return 64 * 1024 * 1024          # conservative: v7x per-TC physical VMEM


def _pick_tile_rows(seq_len: int, row_bytes_x: int, row_bytes_pe: int,
                    sublane: int, budget_bytes: int) -> int:
    """Largest sublane-aligned row-tile fitting the VMEM budget.

    Budget covers: double-buffered x-in + out tiles (4x row_bytes_x), double-buffered
    pe tiles (2x row_bytes_pe), and the in-kernel jnp.tile(pe,(1,B)) temporary
    (1x row_bytes_x) that the previous revision ignored.
    """
    per_row = 5 * row_bytes_x + 2 * row_bytes_pe
    ts = budget_bytes // max(per_row, 1)
    ts = min(int(ts), seq_len)
    ts = (ts // sublane) * sublane
    if ts < sublane:
        # Tiny S: a block equal to the full dim is always legal; otherwise take the
        # minimum aligned tile.
        ts = seq_len if seq_len < sublane else sublane
    return ts


def positional_encoding_forward(x: jnp.ndarray, pe: jnp.ndarray, *,
                                tile_s: int | None = None,
                                donate_x: bool = False,
                                allow_fallback: bool = True) -> jnp.ndarray:
    """x: (S, B, D); pe: (max_len, D) (or (max_len, 1, D)). Returns x + pe[:S]."""
    S, B, D = x.shape
    pe2 = pe.reshape(pe.shape[0], -1)          # accept either (max_len, D) or (max_len, 1, D)
    max_len = pe2.shape[0]
    if pe2.shape[-1] != D:
        raise ValueError(f"pe d_model {pe2.shape[-1]} != x d_model {D}")
    if S > max_len:
        raise ValueError(f"sequence length {S} exceeds positional-encoding max_len {max_len}")
    if pe2.dtype != x.dtype:
        pe2 = pe2.astype(x.dtype)              # one-off cast; normally built in x.dtype already

    lanes = B * D
    if allow_fallback and lanes < 128:
        # Lane-sparse output tiles (masked vst.msk, half-empty vregs) + per-step/call
        # overhead dominate for such tiny shapes: a plain XLA add is strictly better.
        return x + pe2[:S][:, None, :]

    # Free, contiguous reshape: last dim B*D is lane-dense and TS rows fill sublanes,
    # instead of a (B, D) = (sublane, lane) tile that wastes most of each vreg when
    # B < 8 or D < 128.
    x2 = x.reshape(S, lanes)

    itemsize = jnp.dtype(x.dtype).itemsize
    sublane = _sublane_multiple(x.dtype)
    vmem_cap = _vmem_capacity_bytes()
    # Per-chip tile budget: ~32 MiB on v5e/v6e (128 MiB physical), ~32 MiB on v7x
    # (64 MiB physical) -> x-tiles in the 4-8 MiB range, per-grid-step overhead <10%
    # even at v7x's 3.2 TB/s.
    budget = min(vmem_cap // 2, 32 * 1024 * 1024)

    if tile_s is None:
        ts = _pick_tile_rows(S, lanes * itemsize, D * itemsize, sublane, budget)
    else:
        ts = int(tile_s)
        if ts != S and ts % sublane != 0:
            raise ValueError(f"tile_s must be a multiple of {sublane} for dtype {x.dtype} "
                             f"(or equal to seq_len)")
    ts = min(ts, S)

    grid = (pl.cdiv(S, ts),)
    kernel = functools.partial(_add_pe_kernel, batch=B)

    # Memory-bound elementwise op: tell XLA so it can overlap neighbours.
    cost = pl.CostEstimate(
        flops=S * lanes,
        transcendentals=0,
        bytes_accessed=2 * S * lanes * itemsize + S * D * itemsize,
    )
    # Explicit scoped-VMEM limit that covers the double-buffered footprint with margin,
    # but stays well under physical VMEM (v7x: 48 MiB of 64; v5e/v6e: 48 MiB of 128).
    vmem_limit = int(min(vmem_cap * 3 // 4, budget + 16 * 1024 * 1024))

    out2 = pl.pallas_call(
        kernel,
        out_shape=jax.ShapeDtypeStruct((S, lanes), x.dtype),
        grid_spec=pltpu.PrefetchScalarGridSpec(
            num_scalar_prefetch=0,
            grid=grid,
            in_specs=[
                pl.BlockSpec((ts, lanes), lambda i: (i, 0)),   # x rows [i*ts, (i+1)*ts)
                pl.BlockSpec((ts, D), lambda i: (i, 0)),       # matching pe rows from the
            ],                                                 # full buffer (no pe[:S] copy)
            out_specs=pl.BlockSpec((ts, lanes), lambda i: (i, 0)),
        ),
        compiler_params=pltpu.CompilerParams(
            dimension_semantics=("parallel",),                 # shard S across TCs on v7x
            vmem_limit_bytes=vmem_limit,
        ),
        cost_estimate=cost,
        input_output_aliases=({0: 0} if donate_x else {}),     # reuse x's HBM buffer if dead
    )(x2, pe2)

    return out2.reshape(S, B, D)


if __name__ == "__main__":
    key = jax.random.PRNGKey(0)
    k1, k2, k3, k4, k5 = jax.random.split(key, 5)

    # 1) Small lane-dense case (B*D = 128): seq=8, batch=4, d_model=32.
    S, B, D = 8, 4, 32
    max_len = 5000
    x = jax.random.normal(k1, (S, B, D), dtype=jnp.float32)
    pe = make_positional_encoding(D, max_len, dtype=jnp.float32)          # (max_len, D)
    out = jax.block_until_ready(positional_encoding_forward(x, pe))
    ref = x + pe[:S][:, None, :]
    assert out.shape == (S, B, D)
    np.testing.assert_allclose(np.asarray(out), np.asarray(ref), rtol=1e-6, atol=1e-6)

    # 2) Multi-step pipelined grid (tile_s=64 -> 8 steps), larger d_model.
    S2, B2, D2 = 512, 2, 128
    x2 = jax.random.normal(k2, (S2, B2, D2), dtype=jnp.float32)
    pe2 = make_positional_encoding(D2, max_len, dtype=jnp.float32)
    out2 = jax.block_until_ready(positional_encoding_forward(x2, pe2, tile_s=64))
    ref2 = x2 + pe2[:S2][:, None, :]
    np.testing.assert_allclose(np.asarray(out2), np.asarray(ref2), rtol=1e-6, atol=1e-6)

    # 3) Edge-block test: S == max_len with a non-dividing tile (relies on Pallas
    #    edge-block clipping for both x and pe).
    S3, B3, D3, ml3 = 40, 4, 32, 40
    x3 = jax.random.normal(k3, (S3, B3, D3), dtype=jnp.float32)
    pe3 = make_positional_encoding(D3, ml3, dtype=jnp.float32)
    out3 = jax.block_until_ready(positional_encoding_forward(x3, pe3, tile_s=16))
    ref3 = x3 + pe3[:S3][:, None, :]
    np.testing.assert_allclose(np.asarray(out3), np.asarray(ref3), rtol=1e-6, atol=1e-6)

    # 4) bf16 path (dtype-aware sublane alignment: tile_s multiple of 16).
    S4, B4, D4 = 64, 2, 128
    x4 = jax.random.normal(k4, (S4, B4, D4), dtype=jnp.float32).astype(jnp.bfloat16)
    pe4 = make_positional_encoding(D4, max_len, dtype=jnp.bfloat16)
    out4 = jax.block_until_ready(positional_encoding_forward(x4, pe4, tile_s=32))
    ref4 = (x4.astype(jnp.float32) + pe4[:S4].astype(jnp.float32)[:, None, :])
    np.testing.assert_allclose(np.asarray(out4, dtype=np.float32), np.asarray(ref4),
                               rtol=2e-2, atol=2e-2)

    # 5) Lane-sparse fallback path (B*D = 64 < 128 -> plain XLA add).
    S5, B5, D5 = 8, 2, 32
    x5 = jax.random.normal(k5, (S5, B5, D5), dtype=jnp.float32)
    pe5 = make_positional_encoding(D5, max_len, dtype=jnp.float32)
    out5 = jax.block_until_ready(positional_encoding_forward(x5, pe5))
    ref5 = x5 + pe5[:S5][:, None, :]
    np.testing.assert_allclose(np.asarray(out5), np.asarray(ref5), rtol=1e-6, atol=1e-6)

    print("KERNEL_OK")
</pallas_src>

<mosaic_0001>
module attributes {stable_mosaic.version = 11 : i64} {
  func.func @_add_pe_kernel(%arg0: i32, %arg1: memref<8x128xf32, #tpu.memory_space<vmem>>, %arg2: memref<8x32xf32, #tpu.memory_space<vmem>>, %arg3: memref<8x128xf32, #tpu.memory_space<vmem>>) attributes {dimension_semantics = [#tpu.dimension_semantics<parallel>], iteration_bounds = array<i64: 1>, scalar_prefetch = 0 : i64, scratch_operands = 0 : i64, tpu.core_type = #tpu.core_type<tc>, window_params = [{transform_indices = @transform_0, window_bounds = array<i64: 8, 128>}, {transform_indices = @transform_1, window_bounds = array<i64: 8, 32>}, {transform_indices = @transform_2, window_bounds = array<i64: 8, 128>}]} {
    %c0 = arith.constant 0 : index
    %c0_0 = arith.constant 0 : index
    %0 = vector.load %arg2[%c0, %c0_0] : memref<8x32xf32, #tpu.memory_space<vmem>>, vector<8x32xf32>
    %1 = tpu.concatenate %0, %0, %0, %0 in 1 : vector<8x32xf32>, vector<8x32xf32>, vector<8x32xf32>, vector<8x32xf32> -> vector<8x128xf32>
    %c0_1 = arith.constant 0 : index
    %c0_2 = arith.constant 0 : index
    %2 = vector.load %arg1[%c0_1, %c0_2] : memref<8x128xf32, #tpu.memory_space<vmem>>, vector<8x128xf32>
    %3 = arith.addf %2, %1 : vector<8x128xf32>
    %c0_3 = arith.constant 0 : index
    %c0_4 = arith.constant 0 : index
    %4 = vector.load %arg3[%c0_3, %c0_4] : memref<8x128xf32, #tpu.memory_space<vmem>>, vector<8x128xf32>
    tpu.vector_store %arg3[%c0_3, %c0_4], %3 {strides = array<i32>} : memref<8x128xf32, #tpu.memory_space<vmem>>, vector<8x128xf32>,
    return
  }
  func.func @transform_0(%arg0: i32) -> (i32, i32) {
    %c0_i32 = arith.constant 0 : i32
    %c0_i32_0 = arith.constant 0 : i32
    return %arg0, %c0_i32 : i32, i32
  }
  func.func @transform_1(%arg0: i32) -> (i32, i32) {
    %c0_i32 = arith.constant 0 : i32
    %c0_i32_0 = arith.constant 0 : i32
    return %arg0, %c0_i32 : i32, i32
  }
  func.func @transform_2(%arg0: i32) -> (i32, i32) {
    %c0_i32 = arith.constant 0 : i32
    %c0_i32_0 = arith.constant 0 : i32
    return %arg0, %c0_i32 : i32, i32
  }
}

</mosaic_0001>

<llo_original>
// kernel: tpu_custom_call.1
$region0: #{tpu_custom_call.1}
  #allocation0 [shape = 'u32[]', space=smem, size = 0x4, offset = 0x4, fixed_abs, tag = 'smem constant byte address 0x4 - core index']
  #allocation1 [shape = 'u32[144,128]{1,0:T(1,128)}', space=vmem, size = 0x12000, scoped, tag = 'internal scratch']
  %s0 = inlined_call_operand.vmem [shape: f32[8,128], index: 0, kind: input, shape index: {}]
  %s1 = inlined_call_operand.vmem [shape: f32[5000,32], index: 1, kind: input, shape index: {}]
  %s2 = inlined_call_operand.hbm [shape: f32[8,128], index: 2, kind: output, shape index: {}]
  %s3 = sld [smem:[#allocation0]]
  $region18: #{tpu_custom_call.1} parent=0
    _
  %s5 = ssub.s32 1, %s3
  %s6 = scalar_select 0, %s5, %s3
  $region1: #{tpu_custom_call.1} parent=0
    #allocation2 [shape = 'u8[4096]{0}', space=vmem, size = 0x1000, scoped, tag = 'output window, operand 0, single buffered']
    #allocation3 [shape = 's32[1]{0}', space=sflag, size = 0x4, scoped, tag = 'scoped memory for tpu_custom_call.1']
    %7 = vsyncpa [#allocation3], 0
    // Predicated region
    $region2: #{tpu_custom_call.1} parent=1 // pred_check
      _
    $region3: #{tpu_custom_call.1} parent=1 // pred_check_branch
      %9 = sbr.rel (0) target = $region5
    $region4: #{tpu_custom_call.1} parent=1 // pred_region
      _
    $region5: #{tpu_custom_call.1} parent=1 // pred_fallthru
      _
    // Predicated region
    $region6: #{tpu_custom_call.1} parent=1 // pred_check
      _
    $region7: #{tpu_custom_call.1} parent=1 // pred_check_branch
      %11 = sbr.rel (0) target = $region9
    $region8: #{tpu_custom_call.1} parent=1 // pred_region
      _
    $region9: #{tpu_custom_call.1} parent=1 // pred_fallthru
      _
    %v12 = vld [vmem:[%s1] sm:$0xff]
    %14 = vrot.lane.b32.xlu0 %v12, 32
    %v15 = vpop.permute.xlu0 %14
    %17 = vrot.lane.b32.xlu0 %v12, 64
    %v18 = vpop.permute.xlu0 %17
    %20 = vrot.lane.b32.xlu0 %v12, 96
    %v21 = vpop.permute.xlu0 %20
    %vm23 = vcmask 261120
    %v24 = vsel %vm23, %v12, %v15
    %vm25 = vcmask 523264
    %v26 = vsel %vm25, %v24, %v18
    %vm27 = vcmask 785408
    %v28 = vsel %vm27, %v26, %v21
    %v29 = vld [vmem:[%s0] sm:$0xff]
    %v30 = vadd.f32 %v29, %v28
    %31 = vst [vmem:[#allocation2] sm:$0xff] %v30
    // Predicated region
    $region10: #{tpu_custom_call.1} parent=1 // pred_check
      _
    $region11: #{tpu_custom_call.1} parent=1 // pred_check_branch
      %33 = sbr.rel (0) target = $region13
    $region12: #{tpu_custom_call.1} parent=1 // pred_region
      %s35 = ssub.s32 128, 128
      %36 = vsyncadd [#allocation3], %s35
      %s38 = sshll.u32 [#allocation2], 4
      %s39 = int_to_ptr.vmem [resolvable:$true] %s38
      %41 = dma.vmem_to_hbm [thread:$0]  %s39, 128, %s2, [#allocation3]
    $region13: #{tpu_custom_call.1} parent=1 // pred_fallthru
      _
    // Predicated region
    $region14: #{tpu_custom_call.1} parent=1 // pred_check
      _
    $region15: #{tpu_custom_call.1} parent=1 // pred_check_branch
      %43 = sbr.rel (0) target = $region17
    $region16: #{tpu_custom_call.1} parent=1 // pred_region
      %44 = dma.done [#allocation3], 128
    $region17: #{tpu_custom_call.1} parent=1 // pred_fallthru
      _
    %45 = vsyncpa [#allocation3], 1

</llo_original>
